<compile_context>
chip_gen: v7x
topology: tpu7x:2x2x1
jax: 0.10.0
libtpu: 0.0.40
codegen_flags: <defaults>
</compile_context>

<pallas_src>
import jax
import jax.numpy as jnp
from jax.experimental import pallas as pl
from jax.experimental.pallas import tpu as pltpu


def _round_up(x, m):
    return ((x + m - 1) // m) * m


def _vmem_capacity_bytes():
    """Physical VMEM of the current TPU generation (conservative fallback)."""
    try:
        return int(pltpu.get_tpu_info().vmem_capacity_bytes)
    except Exception:
        return 64 * 1024 * 1024  # v7x is the smallest (64 MiB per TC)


def _largest_tile_div(extent, cap, quantum=128):
    """Largest multiple of `quantum` that divides `extent` and is <= cap."""
    if extent % quantum != 0:
        return None
    t = (min(cap, extent) // quantum) * quantum
    while t >= quantum:
        if extent % t == 0:
            return t
        t -= quantum
    return None


def _plan_tiles(B, C, S, itemsize, max_tile_bytes):
    """Pick (ts, grid_s, bb): lane-dense spatial tile + batch block size.

    Returns None only when S is not 128-divisible AND too large for a single
    tile (rare); the caller then falls back to the padded path.
    """
    row_bytes = C * itemsize
    if S * row_bytes <= max_tile_bytes:
        ts = S                                   # full spatial extent: always legal
    else:
        max_ts = max(128, (max_tile_bytes // row_bytes) // 128 * 128)
        ts = _largest_tile_div(S, max_ts)
        if ts is None:
            return None
    grid_s = S // ts

    # Batch blocking: merge batch rows into one DMA when the per-step tile is
    # small (<1 MiB).  Keep >= 2 total grid steps so v7x's 2nd TC stays busy;
    # cap bb at 64 to bound in-kernel unrolling.
    bb = 1
    tile_bytes = ts * row_bytes
    if B > 1 and tile_bytes < (1 << 20):
        for cand in range(min(B, 64), 0, -1):
            if B % cand:
                continue
            if cand * tile_bytes <= max_tile_bytes and (B // cand) * grid_s >= 2:
                bb = cand
                break

    # Megacore balance: a 1-step grid leaves one v7x TensorCore idle — split
    # the spatial axis when possible (negligible overhead on v5e/v6e).
    if B == 1 and grid_s == 1:
        ts_half = _largest_tile_div(S, S // 2)
        if ts_half is not None:
            ts, grid_s = ts_half, S // ts_half
    return ts, grid_s, bb


# ----------------------------------------------------------------------------
# Pallas kernels: z[b, :, tile] = W @ x[b, :, tile]
# ----------------------------------------------------------------------------
def _conv1x1_mxu_kernel(w_ref, x_ref, o_ref):
    # w_ref: (C, C) weight, resident across the grid.
    # x_ref / o_ref: (bb, C, TS) tiles (channels on sublanes, spatial on lanes).
    w = w_ref[...].astype(jnp.float32)
    for b in range(x_ref.shape[0]):          # static unroll over the batch block
        o_ref[b] = jnp.dot(
            w, x_ref[b].astype(jnp.float32),
            preferred_element_type=jnp.float32,
        ).astype(o_ref.dtype)


def _conv1x1_vpu_kernel(w_ref, x_ref, o_ref):
    # Tiny-C path: out[co, :] = sum_c w[co, c] * x[c, :] as C broadcast MACs
    # per batch row.  Avoids a K=C=4 MXU matmul (~3% MXU utilization); the op
    # is HBM-BW bound so the VALU work is hidden under the DMA either way.
    # TODO(synk): stride-0 sublane-broadcast loads / SMEM weight splats would
    # remove a couple of broadcast ops per MAC; irrelevant while DMA-bound.
    w = w_ref[...].astype(jnp.float32)        # (C, C)
    c_dim = w.shape[0]
    for b in range(x_ref.shape[0]):           # static unroll over the batch block
        x = x_ref[b].astype(jnp.float32)      # (C, TS)
        acc = w[:, 0:1] * x[0:1, :]
        for c in range(1, c_dim):
            acc = acc + w[:, c:c + 1] * x[c:c + 1, :]
        o_ref[b] = acc.astype(o_ref.dtype)


# ----------------------------------------------------------------------------
# Wrapper
# ----------------------------------------------------------------------------
def conv1x1_pallas(x_nchw, weight, *, io_dtype=None, max_tile_bytes=4 * 1024 * 1024):
    """z = conv2d(x, weight.view(C, C, 1, 1)) on native NCHW via Pallas.

    io_dtype: optional activation dtype at the kernel boundary (e.g.
    jnp.bfloat16 ~2x HBM-BW win); accumulation stays in f32.  Default None
    keeps the input dtype exactly (bit-faithful f32 path for flow models).
    """
    B, C, H, W = x_nchw.shape
    S = H * W
    in_dtype = jnp.dtype(io_dtype) if io_dtype is not None else x_nchw.dtype
    itemsize = jnp.dtype(in_dtype).itemsize

    # Free reshape: NCHW spatial dims are already contiguous.
    x3 = x_nchw.reshape(B, C, S)
    if x3.dtype != in_dtype:
        x3 = x3.astype(in_dtype)

    # Generation-aware VMEM budget: ~55% of physical capacity (v7x: 64 MiB,
    # v5e/v6e: 128 MiB), 4 double-buffered tiles + weight + headroom.  Tiles
    # beyond ~4 MiB don't buy more HBM BW (roofline plateau), so cap there.
    vmem_cap = _vmem_capacity_bytes()
    vmem_budget = min(int(vmem_cap * 0.55), 96 * 1024 * 1024)
    max_tile_bytes = min(max_tile_bytes, vmem_budget // 5)

    plan = _plan_tiles(B, C, S, itemsize, max_tile_bytes)
    if plan is not None:
        ts, grid_s, bb = plan
        s_full = S
        padded = False
    else:
        # Rare fallback: S not 128-divisible and too large for one tile.
        # Pad (zeros conv to zeros; sliced off below) at the cost of extra
        # HBM passes — only hit for pathological spatial extents.
        max_ts = max(128, (max_tile_bytes // (C * itemsize)) // 128 * 128)
        ts = min(max_ts, _round_up(S, 128))
        grid_s = pl.cdiv(S, ts)
        s_full = grid_s * ts
        x3 = jnp.pad(x3, ((0, 0), (0, 0), (0, s_full - S)))
        bb = 1
        padded = True
    grid_b = B // bb

    kernel = _conv1x1_vpu_kernel if C <= 8 else _conv1x1_mxu_kernel

    # Raise the scoped-VMEM limit only when the double-buffered footprint
    # exceeds the smallest default (16 MiB on v5e); never above ~55% capacity.
    tile_bytes = bb * C * ts * itemsize
    vmem_needed = 4 * tile_bytes + 2 * C * C * 4 + (1 << 20)
    compiler_kwargs = dict(dimension_semantics=("parallel", "parallel"))
    if vmem_needed > 12 * 1024 * 1024:
        compiler_kwargs["vmem_limit_bytes"] = int(
            min(_round_up(2 * vmem_needed, 1 << 20), vmem_budget))

    cost = pl.CostEstimate(
        flops=2 * B * s_full * C * C,
        transcendentals=0,
        bytes_accessed=2 * B * C * s_full * itemsize
        + C * C * jnp.dtype(weight.dtype).itemsize,
    )

    z3 = pl.pallas_call(
        kernel,
        out_shape=jax.ShapeDtypeStruct((B, C, s_full), in_dtype),
        grid_spec=pltpu.PrefetchScalarGridSpec(
            num_scalar_prefetch=0,
            grid=(grid_b, grid_s),
            in_specs=[
                pl.BlockSpec((C, C), lambda b, s: (0, 0)),
                pl.BlockSpec((bb, C, ts), lambda b, s: (b, 0, s)),
            ],
            out_specs=pl.BlockSpec((bb, C, ts), lambda b, s: (b, 0, s)),
        ),
        compiler_params=pltpu.CompilerParams(**compiler_kwargs),
        cost_estimate=cost,
    )(weight, x3)

    if padded:
        z3 = z3[:, :, :S]
    return z3.reshape(B, C, H, W)


# ----------------------------------------------------------------------------
# Parameter construction (mirrors InvertibleConv1x1.__init__, deterministic)
# ----------------------------------------------------------------------------
def init_invertible_conv1x1(key, num_channels, LU_decomposed):
    w_init = jnp.linalg.qr(
        jax.random.normal(key, (num_channels, num_channels), dtype=jnp.float32)
    )[0]
    params = {"LU_decomposed": LU_decomposed, "num_channels": num_channels}
    if not LU_decomposed:
        params["weight"] = w_init
    else:
        p, lower, upper = jax.scipy.linalg.lu(w_init)  # A = P @ L @ U
        s = jnp.diag(upper)
        params["p"] = p
        params["sign_s"] = jnp.sign(s)
        params["log_s"] = jnp.log(jnp.abs(s))
        params["lower"] = lower
        params["upper"] = jnp.triu(upper, 1)
        params["l_mask"] = jnp.tril(
            jnp.ones((num_channels, num_channels), jnp.float32), -1
        )
        params["eye"] = jnp.eye(num_channels, dtype=jnp.float32)
    return params


def _get_weight(params, h, w, reverse):
    """Mirrors InvertibleConv1x1.get_weight (plain-JAX glue, tiny CxC math)."""
    if not params["LU_decomposed"]:
        weight = params["weight"]
        dlogdet = jnp.linalg.slogdet(weight)[1] * h * w
        if reverse:
            weight = jnp.linalg.inv(weight)
    else:
        lower = params["lower"] * params["l_mask"] + params["eye"]
        u = params["upper"] * params["l_mask"].T
        u = u + jnp.diag(params["sign_s"] * jnp.exp(params["log_s"]))
        dlogdet = jnp.sum(params["log_s"]) * h * w
        if reverse:
            u_inv = jnp.linalg.inv(u)
            l_inv = jnp.linalg.inv(lower)
            p_inv = jnp.linalg.inv(params["p"])
            weight = u_inv @ (l_inv @ p_inv)
        else:
            weight = params["p"] @ (lower @ u)
    return weight, dlogdet


def invertible_conv1x1_forward(params, x, logdet=None, reverse=False,
                               io_dtype=None):
    """Forward pass matching InvertibleConv1x1.forward (NCHW input)."""
    _, _, h, w = x.shape
    weight, dlogdet = _get_weight(params, h, w, reverse)
    z = conv1x1_pallas(x, weight, io_dtype=io_dtype)
    if logdet is not None:
        logdet = logdet + dlogdet if not reverse else logdet - dlogdet
    return z, logdet


# ----------------------------------------------------------------------------
if __name__ == "__main__":
    key = jax.random.PRNGKey(0)
    k_param, k_x = jax.random.split(key)

    # ---- Case 1: tiny-C VPU path (LU params), forward + reverse ------------
    B, C, H, W = 2, 4, 16, 16
    params = init_invertible_conv1x1(k_param, C, LU_decomposed=True)
    x = jax.random.normal(k_x, (B, C, H, W), dtype=jnp.float32)
    logdet0 = jnp.zeros((B,), dtype=jnp.float32)

    z, logdet = invertible_conv1x1_forward(params, x, logdet=logdet0,
                                           reverse=False)
    z = jax.block_until_ready(z)
    logdet = jax.block_until_ready(logdet)

    weight, dlogdet = _get_weight(params, H, W, reverse=False)
    z_ref = jnp.einsum("oc,bchw->bohw", weight, x)
    assert z.shape == (B, C, H, W)
    assert jnp.allclose(z, z_ref, atol=1e-5, rtol=1e-5)
    assert jnp.allclose(logdet, logdet0 + dlogdet, atol=1e-5, rtol=1e-5)

    z_rev, logdet_rev = invertible_conv1x1_forward(params, z, logdet=logdet,
                                                   reverse=True)
    z_rev = jax.block_until_ready(z_rev)
    assert jnp.allclose(z_rev, x, atol=1e-4, rtol=1e-4)
    assert jnp.allclose(logdet_rev, logdet0, atol=1e-4, rtol=1e-4)

    # ---- Case 2: MXU path (C > 8) with batch blocking (bb > 1) -------------
    B2, C2 = 8, 32
    params2 = init_invertible_conv1x1(k_param, C2, LU_decomposed=False)
    x2 = jax.random.normal(k_x, (B2, C2, H, W), dtype=jnp.float32)
    z2, _ = invertible_conv1x1_forward(params2, x2, logdet=None, reverse=False)
    z2 = jax.block_until_ready(z2)
    w2, _ = _get_weight(params2, H, W, reverse=False)
    z2_ref = jnp.einsum("oc,bchw->bohw", w2, x2)
    assert jnp.allclose(z2, z2_ref, atol=1e-4, rtol=1e-4)

    # ---- Case 3: single-batch input (exercises the megacore spatial split) -
    z1, _ = invertible_conv1x1_forward(params, x[:1], logdet=None,
                                       reverse=False)
    z1 = jax.block_until_ready(z1)
    assert jnp.allclose(z1, z_ref[:1], atol=1e-5, rtol=1e-5)

    # ---- Case 4: opt-in bf16 activation I/O (bandwidth-bound ~2x win) ------
    z_bf16, _ = invertible_conv1x1_forward(params, x, logdet=None,
                                           reverse=False,
                                           io_dtype=jnp.bfloat16)
    z_bf16 = jax.block_until_ready(z_bf16)
    z_bf16_ref = jnp.einsum("oc,bchw->bohw", weight,
                            x.astype(jnp.bfloat16).astype(jnp.float32))
    assert z_bf16.dtype == jnp.bfloat16
    assert jnp.allclose(z_bf16.astype(jnp.float32), z_bf16_ref,
                        atol=3e-2, rtol=3e-2)

    print("KERNEL_OK")
</pallas_src>

<mosaic_0001>
module attributes {stable_mosaic.version = 11 : i64} {
  func.func @_conv1x1_vpu_kernel(%arg0: i32, %arg1: i32, %arg2: memref<4x4xf32, #tpu.memory_space<vmem>>, %arg3: memref<1x4x256xf32, #tpu.memory_space<vmem>>, %arg4: memref<1x4x256xf32, #tpu.memory_space<vmem>>) attributes {dimension_semantics = [#tpu.dimension_semantics<parallel>, #tpu.dimension_semantics<parallel>], iteration_bounds = array<i64: 2, 1>, scalar_prefetch = 0 : i64, scratch_operands = 0 : i64, tpu.core_type = #tpu.core_type<tc>, window_params = [{pipeline_mode = #tpu.pipeline_mode<synchronous>, transform_indices = @transform_0, window_bounds = array<i64: 4, 4>}, {transform_indices = @transform_1, window_bounds = array<i64: 1, 4, 256>}, {transform_indices = @transform_2, window_bounds = array<i64: 1, 4, 256>}]} {
    %c0 = arith.constant 0 : index
    %c0_0 = arith.constant 0 : index
    %0 = vector.load %arg2[%c0, %c0_0] : memref<4x4xf32, #tpu.memory_space<vmem>>, vector<4x4xf32>
    %c0_1 = arith.constant 0 : index
    %c0_2 = arith.constant 0 : index
    %c0_3 = arith.constant 0 : index
    %1 = vector.load %arg3[%c0_1, %c0_2, %c0_3] : memref<1x4x256xf32, #tpu.memory_space<vmem>>, vector<1x4x256xf32>
    %2 = vector.shape_cast %1 : vector<1x4x256xf32> to vector<4x256xf32>
    %3 = vector.extract_strided_slice %0 {offsets = [0, 0], sizes = [4, 1], strides = [1, 1]} : vector<4x4xf32> to vector<4x1xf32>
    %4 = vector.extract_strided_slice %2 {offsets = [0, 0], sizes = [1, 256], strides = [1, 1]} : vector<4x256xf32> to vector<1x256xf32>
    %5 = vector.broadcast %3 : vector<4x1xf32> to vector<4x256xf32>
    %6 = vector.broadcast %4 : vector<1x256xf32> to vector<4x256xf32>
    %7 = arith.mulf %5, %6 : vector<4x256xf32>
    %8 = vector.extract_strided_slice %0 {offsets = [0, 1], sizes = [4, 1], strides = [1, 1]} : vector<4x4xf32> to vector<4x1xf32>
    %9 = vector.extract_strided_slice %2 {offsets = [1, 0], sizes = [1, 256], strides = [1, 1]} : vector<4x256xf32> to vector<1x256xf32>
    %10 = vector.broadcast %8 : vector<4x1xf32> to vector<4x256xf32>
    %11 = vector.broadcast %9 : vector<1x256xf32> to vector<4x256xf32>
    %12 = arith.mulf %10, %11 : vector<4x256xf32>
    %13 = arith.addf %7, %12 : vector<4x256xf32>
    %14 = vector.extract_strided_slice %0 {offsets = [0, 2], sizes = [4, 1], strides = [1, 1]} : vector<4x4xf32> to vector<4x1xf32>
    %15 = vector.extract_strided_slice %2 {offsets = [2, 0], sizes = [1, 256], strides = [1, 1]} : vector<4x256xf32> to vector<1x256xf32>
    %16 = vector.broadcast %14 : vector<4x1xf32> to vector<4x256xf32>
    %17 = vector.broadcast %15 : vector<1x256xf32> to vector<4x256xf32>
    %18 = arith.mulf %16, %17 : vector<4x256xf32>
    %19 = arith.addf %13, %18 : vector<4x256xf32>
    %20 = vector.extract_strided_slice %0 {offsets = [0, 3], sizes = [4, 1], strides = [1, 1]} : vector<4x4xf32> to vector<4x1xf32>
    %21 = vector.extract_strided_slice %2 {offsets = [3, 0], sizes = [1, 256], strides = [1, 1]} : vector<4x256xf32> to vector<1x256xf32>
    %22 = vector.broadcast %20 : vector<4x1xf32> to vector<4x256xf32>
    %23 = vector.broadcast %21 : vector<1x256xf32> to vector<4x256xf32>
    %24 = arith.mulf %22, %23 : vector<4x256xf32>
    %25 = arith.addf %19, %24 : vector<4x256xf32>
    %c0_4 = arith.constant 0 : index
    %c0_5 = arith.constant 0 : index
    %c0_6 = arith.constant 0 : index
    %26 = vector.load %arg4[%c0_4, %c0_5, %c0_6] : memref<1x4x256xf32, #tpu.memory_space<vmem>>, vector<1x4x256xf32>
    %27 = vector.shape_cast %26 : vector<1x4x256xf32> to vector<4x256xf32>
    %28 = vector.shape_cast %25 : vector<4x256xf32> to vector<1x4x256xf32>
    tpu.vector_store %arg4[%c0_4, %c0_5, %c0_6], %28 {strides = array<i32>} : memref<1x4x256xf32, #tpu.memory_space<vmem>>, vector<1x4x256xf32>,
    return
  }
  func.func @transform_0(%arg0: i32, %arg1: i32) -> (i32, i32) {
    %c0_i32 = arith.constant 0 : i32
    %c0_i32_0 = arith.constant 0 : i32
    %c0_i32_1 = arith.constant 0 : i32
    return %c0_i32, %c0_i32_0 : i32, i32
  }
  func.func @transform_1(%arg0: i32, %arg1: i32) -> (i32, i32, i32) {
    %c0_i32 = arith.constant 0 : i32
    %c0_i32_0 = arith.constant 0 : i32
    return %arg0, %c0_i32, %arg1 : i32, i32, i32
  }
  func.func @transform_2(%arg0: i32, %arg1: i32) -> (i32, i32, i32) {
    %c0_i32 = arith.constant 0 : i32
    %c0_i32_0 = arith.constant 0 : i32
    return %arg0, %c0_i32, %arg1 : i32, i32, i32
  }
}

</mosaic_0001>

<llo_original>
// kernel: tpu_custom_call.1
$region0: #{tpu_custom_call.1}
  #allocation0 [shape = 'u32[]', space=smem, size = 0x4, offset = 0x4, fixed_abs, tag = 'smem constant byte address 0x4 - core index']
  #allocation1 [shape = 'u32[144,128]{1,0:T(1,128)}', space=vmem, size = 0x12000, scoped, tag = 'internal scratch']
  %s0 = inlined_call_operand.hbm [shape: f32[4,4], index: 0, kind: input, shape index: {}]
  %s1 = inlined_call_operand.hbm [shape: f32[2,4,256], index: 1, kind: input, shape index: {}]
  %s2 = inlined_call_operand.hbm [shape: f32[2,4,256], index: 2, kind: output, shape index: {}]
  %s3 = sld [smem:[#allocation0]]
  $region49: #{tpu_custom_call.1} parent=0
    _
  %s5 = ssub.s32 1, %s3
  %s6 = scalar_select 0, %s5, %s3
  $region1: #{tpu_custom_call.1} parent=0
    #allocation2 [shape = 'u8[2048]{0}', space=vmem, size = 0x800, scoped, tag = 'input window, operand 0, single buffered']
    #allocation3 [shape = 's32[2]{0}', space=sflag, size = 0x8, scoped, tag = 'scoped memory for tpu_custom_call.1']
    #allocation4 [shape = 's32[2]{0}', space=sflag, size = 0x8, scoped, tag = 'scoped memory for tpu_custom_call.1']
    #allocation5 [shape = 'u8[8192]{0}', space=vmem, size = 0x2000, scoped, tag = 'input window, operand 1']
    #allocation6 [shape = 's32[2]{0}', space=sflag, size = 0x8, scoped, tag = 'scoped memory for tpu_custom_call.1']
    #allocation7 [shape = 'u8[8192]{0}', space=vmem, size = 0x2000, scoped, tag = 'output window, operand 0']
    %7 = vsyncpa [#allocation3], 0
    %8 = vsyncpa [#allocation6], 0
    %s9 = scalar_lea.sflag [#allocation6], 1
    %10 = vsyncpa %s9, 0
    %11 = vsyncpa [#allocation4], 0
    %s12 = scalar_lea.sflag [#allocation4], 1
    %13 = vsyncpa %s12, 0
    loop: start=0, step=1, limit=4
    $region2: #{tpu_custom_call.1} parent=1 // loop_pre_header
      _
    $region3: #{tpu_custom_call.1} parent=1 // loop_header
      %s15 = sphi 0, %s19
      %p16 = scmp.ge.s32.totalorder %s15, 4
      %s22 = sphi 0, %s34
      %s23 = sphi 0, %s30
      %s24 = sphi 0, %s22
      %s25 = sphi 0, %s23
      %s26 = sphi 0, %s24
      %s27 = sphi 0, %s25
      %s35 = sphi 0, %s35
      %s37 = sphi 0, %s35
      %s38 = sphi 0, %s37
      %s52 = sphi 0, %s38
      %s60 = sphi 0, %s62
      %s63 = sphi 0, %s60
      %s64 = sphi 0, %s63
      %s80 = sphi 0, %s64
      %s88 = sphi 0, %s90
      %s91 = sphi 0, %s88
      %s92 = sphi 0, %s91
      %s108 = sphi 0, %s92
    $region4: #{tpu_custom_call.1} parent=1 // loop_header_branch
      %18 = sbr.rel (%p16) target = $region8
    $region5: #{tpu_custom_call.1} parent=1 // loop_body
      %s20 = ssub.s32 %s15, 1
      %s21 = ssub.s32 %s15, 2
      %s28 = sadd.s32 1, %s23
      %p29 = scmp.ge.s32.totalorder %s28, 1
      %s30 = scalar_select %p29, 0, %s28
      %s31 = sadd.s32 1, %s22
      %s32 = scalar_select %p29, %s31, %s22
      %p33 = scmp.ge.s32.totalorder %s32, 2
      %s34 = scalar_select %p33, 0, %s32
      %s36 = sadd.s32 %s35, 1
      %p39 = scmp.eq.s32.totalorder %s15, 1
      %p40 = scmp.ne.s32.totalorder %s35, %s37
      %p41 = scmp.eq.s32.totalorder %s15, 0
      %p42 = por %p40, %p41
      %p43 = scmp.ne.s32.totalorder %s35, %s37
      %p44 = scmp.eq.s32.totalorder %s20, 1
      %p45 = por %p43, %p44
      %p46 = scmp.ne.s32.totalorder %s37, %s38
      %p47 = scmp.eq.s32.totalorder %s20, 0
      %p48 = por %p46, %p47
      %p49 = scmp.ne.s32.totalorder %s37, %s38
      %p50 = scmp.eq.s32.totalorder %s21, 1
      %p51 = por %p49, %p50
      %p53 = scmp.ne.s32.totalorder %s38, %s52
      %p54 = scmp.eq.s32.totalorder %s21, 0
      %p55 = por %p53, %p54
      %s56 = ssub.s32 %s22, %s34
      %s57 = ssub.s32 %s23, %s30
      %s58 = sor.u32 %s56, %s57
      %p59 = scmp.eq.s32.totalorder %s58, 0
      %s61 = sadd.s32 %s60, 1
      %s62 = scalar_select %p59, %s60, %s61
      %p65 = pneg %p59
      %p66 = scmp.eq.s32.totalorder %s15, 1
      %p67 = por %p65, %p66
      %p68 = scmp.ne.s32.totalorder %s60, %s63
      %p69 = scmp.eq.s32.totalorder %s15, 0
      %p70 = por %p68, %p69
      %p71 = scmp.ne.s32.totalorder %s60, %s63
      %p72 = scmp.eq.s32.totalorder %s20, 1
      %p73 = por %p71, %p72
      %p74 = scmp.ne.s32.totalorder %s63, %s64
      %p75 = scmp.eq.s32.totalorder %s20, 0
      %p76 = por %p74, %p75
      %p77 = scmp.ne.s32.totalorder %s63, %s64
      %p78 = scmp.eq.s32.totalorder %s21, 1
      %p79 = por %p77, %p78
      %p81 = scmp.ne.s32.totalorder %s64, %s80
      %p82 = scmp.eq.s32.totalorder %s21, 0
      %p83 = por %p81, %p82
      %s84 = ssub.s32 %s22, %s34
      %s85 = ssub.s32 %s23, %s30
      %s86 = sor.u32 %s84, %s85
      %p87 = scmp.eq.s32.totalorder %s86, 0
      %s89 = sadd.s32 %s88, 1
      %s90 = scalar_select %p87, %s88, %s89
      %p93 = pneg %p87
      %p94 = scmp.eq.s32.totalorder %s15, 1
      %p95 = por %p93, %p94
      %p96 = scmp.ne.s32.totalorder %s88, %s91
      %p97 = scmp.eq.s32.totalorder %s15, 0
      %p98 = por %p96, %p97
      %p99 = scmp.ne.s32.totalorder %s88, %s91
      %p100 = scmp.eq.s32.totalorder %s20, 1
      %p101 = por %p99, %p100
      %p102 = scmp.ne.s32.totalorder %s91, %s92
      %p103 = scmp.eq.s32.totalorder %s20, 0
      %p104 = por %p102, %p103
      %p105 = scmp.ne.s32.totalorder %s91, %s92
      %p106 = scmp.eq.s32.totalorder %s21, 1
      %p107 = por %p105, %p106
      %p109 = scmp.ne.s32.totalorder %s92, %s108
      %p110 = scmp.eq.s32.totalorder %s21, 0
      %p111 = por %p109, %p110
      %p112 = scmp.le.s32.totalorder 1, %s15
      %p113 = scmp.lt.s32.totalorder %s15, 3
      %p114 = pnand %p112, %p113
      %p115 = pneg %p114
      // Predicated region
      $region9: #{tpu_custom_call.1} parent=5 // pred_check
        _
      $region10: #{tpu_custom_call.1} parent=5 // pred_check_branch
        %117 = sbr.rel (%p114) target = $region12
      $region11: #{tpu_custom_call.1} parent=5 // pred_region
        %s118 = ssub.s32 %s15, 1
        // Predicated region
        $region13: #{tpu_custom_call.1} parent=11 // pred_check
          %p119 = pneg %p48
        $region14: #{tpu_custom_call.1} parent=11 // pred_check_branch
          %121 = sbr.rel (%p119) target = $region16
        $region15: #{tpu_custom_call.1} parent=11 // pred_region
          %s123 = ssub.s32 64, 64
          %124 = vsyncadd [#allocation3], %s123
          %s126 = sshll.u32 [#allocation2], 4
          %s127 = int_to_ptr.vmem [resolvable:$true] %s126
          %129 = dma.hbm_to_vmem [thread:$0]  %s0, 64, %s127, [#allocation3]
        $region16: #{tpu_custom_call.1} parent=11 // pred_fallthru
          _
      $region12: #{tpu_custom_call.1} parent=5 // pred_fallthru
        _
      %p130 = scmp.lt.s32.totalorder %s15, 2
      // Predicated region
      $region17: #{tpu_custom_call.1} parent=5 // pred_check
        %p131 = pneg %p130
      $region18: #{tpu_custom_call.1} parent=5 // pred_check_branch
        %133 = sbr.rel (%p131) target = $region20
      $region19: #{tpu_custom_call.1} parent=5 // pred_region
        // Predicated region
        $region21: #{tpu_custom_call.1} parent=19 // pred_check
          %p134 = pneg %p70
        $region22: #{tpu_custom_call.1} parent=19 // pred_check_branch
          %136 = sbr.rel (%p134) target = $region24
        $region23: #{tpu_custom_call.1} parent=19 // pred_region
          %s137 = sand.u32 %s60, 1
          %s138 = scalar_lea.sflag [#allocation6], %s137
          %s139 = sand.u32 %s60, 1
          %s140 = smul.addr %s139, 8
          %s141 = scalar_lea.vmem [#allocation5], %s140
          %s142 = smul.u32 2, %s23
          %s144 = ssub.s32 128, 128
          %145 = vsyncadd %s138, %s144
          %s146 = smul.addr %s22, 2
          %s147 = sadd.s32 %s142, %s146
          %s148 = smul.addr %s147, 64
          %s149 = scalar_lea.hbm %s1, %s148
          %s151 = sshll.u32 %s141, 4
          %s152 = int_to_ptr.vmem [resolvable:$true] %s151
          %154 = dma.hbm_to_vmem [thread:$0]  %s149, 128, %s152, %s138
        $region24: #{tpu_custom_call.1} parent=19 // pred_fallthru
          _
      $region20: #{tpu_custom_call.1} parent=5 // pred_fallthru
        _
      %p155 = scmp.le.s32.totalorder 1, %s15
      %p156 = scmp.lt.s32.totalorder %s15, 3
      %p157 = pnand %p155, %p156
      %p158 = pneg %p157
      // Predicated region
      $region25: #{tpu_custom_call.1} parent=5 // pred_check
        _
      $region26: #{tpu_custom_call.1} parent=5 // pred_check_branch
        %160 = sbr.rel (%p157) target = $region28
      $region27: #{tpu_custom_call.1} parent=5 // pred_region
        %s161 = ssub.s32 %s15, 1
        // Predicated region
        $region29: #{tpu_custom_call.1} parent=27 // pred_check
          %p162 = pneg %p48
        $region30: #{tpu_custom_call.1} parent=27 // pred_check_branch
          %164 = sbr.rel (%p162) target = $region32
        $region31: #{tpu_custom_call.1} parent=27 // pred_region
          %165 = dma.done [#allocation3], 64
        $region32: #{tpu_custom_call.1} parent=27 // pred_fallthru
          _
        %s166 = sand.u32 %s63, 1
        %s167 = scalar_lea.sflag [#allocation6], %s166
        %s168 = sand.u32 %s63, 1
        %s169 = smul.addr %s168, 8
        %s170 = scalar_lea.vmem [#allocation5], %s169
        // Predicated region
        $region33: #{tpu_custom_call.1} parent=27 // pred_check
          %p171 = pneg %p76
        $region34: #{tpu_custom_call.1} parent=27 // pred_check_branch
          %173 = sbr.rel (%p171) target = $region36
        $region35: #{tpu_custom_call.1} parent=27 // pred_region
          %174 = dma.done %s167, 128
        $region36: #{tpu_custom_call.1} parent=27 // pred_fallthru
          _
        %p175 = pneg %p48
        %p176 = pneg %p45
        %s177 = sand.u32 %s63, 1
        %s178 = scalar_lea.sflag [#allocation6], %s177
        %s179 = sand.u32 %s63, 1
        %s180 = smul.addr %s179, 8
        %s181 = scalar_lea.vmem [#allocation5], %s180
        %p182 = pneg %p76
        %p183 = pneg %p73
        %p184 = pneg %p104
        %p185 = pneg %p101
        %s186 = sand.u32 %s91, 1
        %s187 = scalar_lea.sflag [#allocation4], %s186
        %s188 = sand.u32 %s91, 1
        %s189 = smul.addr %s188, 8
        %s190 = scalar_lea.vmem [#allocation7], %s189
        %s191 = smul.u32 2, %s25
        %s192 = smul.u32 2, %s25
        %v193 = vld [vmem:[#allocation2] sm:$0xf]
        %v194 = vld [vmem:[%s170] sm:$0xff]
        %196 = vset.pattern.permute.xlu0 0
        %197 = vperm.xlu0 %196, %v193
        %v198 = vpop.permute.xlu0 %197
        %v201 = vlaneseq
        %v202 = vshrl.u32 %v201, 7
        %v203 = vsub.s32 0, %v202
        %v204 = vrot.slane %v194, %v203
        %v205 = vlaneseq
        %v206 = vshrl.u32 %v205, 7
        %v207 = vsub.s32 4, %v206
        %v208 = vrot.slane %v194, %v207
        %v211 = vlaneseq
        %v212 = vshrl.u32 %v211, 7
        %v213 = vsub.s32 0, %v212
        %v214 = vrot.slane %v204, %v213
        %v215 = vlaneseq
        %v216 = vshrl.u32 %v215, 7
        %v217 = vsub.s32 0, %v216
        %v218 = vrot.slane %v208, %v217
        %v219 = vmul.f32 %v198, %v214
        %v220 = vmul.f32 %v198, %v218
        %221 = vset.pattern.permute.xlu0 1
        %222 = vperm.xlu0 %221, %v193
        %v223 = vpop.permute.xlu0 %222
        %v225 = vlaneseq
        %v226 = vshrl.u32 %v225, 7
        %v227 = vsub.s32 1, %v226
        %v228 = vrot.slane %v194, %v227
        %v229 = vlaneseq
        %v230 = vshrl.u32 %v229, 7
        %v231 = vsub.s32 5, %v230
        %v232 = vrot.slane %v194, %v231
        %v235 = vlaneseq
        %v236 = vshrl.u32 %v235, 7
        %v237 = vsub.s32 1, %v236
        %v238 = vrot.slane %v228, %v237
        %v239 = vlaneseq
        %v240 = vshrl.u32 %v239, 7
        %v241 = vsub.s32 1, %v240
        %v242 = vrot.slane %v232, %v241
        %v243 = vmul.f32 %v223, %v238
        %v244 = vmul.f32 %v223, %v242
        %v245 = vadd.f32 %v219, %v243
        %v246 = vadd.f32 %v220, %v244
        %247 = vset.pattern.permute.xlu0 2
        %248 = vperm.xlu0 %247, %v193
        %v249 = vpop.permute.xlu0 %248
        %v251 = vlaneseq
        %v252 = vshrl.u32 %v251, 7
        %v253 = vsub.s32 2, %v252
        %v254 = vrot.slane %v194, %v253
        %v255 = vlaneseq
        %v256 = vshrl.u32 %v255, 7
        %v257 = vsub.s32 6, %v256
        %v258 = vrot.slane %v194, %v257
        %v261 = vlaneseq
        %v262 = vshrl.u32 %v261, 7
        %v263 = vsub.s32 2, %v262
        %v264 = vrot.slane %v254, %v263
        %v265 = vlaneseq
        %v266 = vshrl.u32 %v265, 7
        %v267 = vsub.s32 2, %v266
        %v268 = vrot.slane %v258, %v267
        %v269 = vmul.f32 %v249, %v264
        %v270 = vmul.f32 %v249, %v268
        %v271 = vadd.f32 %v245, %v269
        %v272 = vadd.f32 %v246, %v270
        %273 = vset.pattern.permute.xlu0 3
        %274 = vperm.xlu0 %273, %v193
        %v275 = vpop.permute.xlu0 %274
        %v277 = vlaneseq
        %v278 = vshrl.u32 %v277, 7
        %v279 = vsub.s32 3, %v278
        %v280 = vrot.slane %v194, %v279
        %v281 = vlaneseq
        %v282 = vshrl.u32 %v281, 7
        %v283 = vsub.s32 7, %v282
        %v284 = vrot.slane %v194, %v283
        %v287 = vlaneseq
        %v288 = vshrl.u32 %v287, 7
        %v289 = vsub.s32 3, %v288
        %v290 = vrot.slane %v280, %v289
        %v291 = vlaneseq
        %v292 = vshrl.u32 %v291, 7
        %v293 = vsub.s32 3, %v292
        %v294 = vrot.slane %v284, %v293
        %v295 = vmul.f32 %v275, %v290
        %v296 = vmul.f32 %v275, %v294
        %v297 = vadd.f32 %v271, %v295
        %v298 = vadd.f32 %v272, %v296
        %v301 = vcombine.low %v297, %v298
        %303 = vst [vmem:[%s190] sm:$0xff] %v301
        %s304 = sand.u32 %s91, 1
        %s305 = scalar_lea.sflag [#allocation4], %s304
        %s306 = sand.u32 %s91, 1
        %s307 = smul.addr %s306, 8
        %s308 = scalar_lea.vmem [#allocation7], %s307
        // Predicated region
        $region37: #{tpu_custom_call.1} parent=27 // pred_check
          %p309 = pneg %p101
        $region38: #{tpu_custom_call.1} parent=27 // pred_check_branch
          %311 = sbr.rel (%p309) target = $region40
        $region39: #{tpu_custom_call.1} parent=27 // pred_region
          %s312 = smul.u32 2, %s25
          %s314 = ssub.s32 128, 128
          %315 = vsyncadd %s305, %s314
          %s316 = smul.addr %s24, 2
          %s317 = sadd.s32 %s312, %s316
          %s318 = smul.addr %s317, 64
          %s319 = scalar_lea.hbm %s2, %s318
          %s321 = sshll.u32 %s308, 4
          %s322 = int_to_ptr.vmem [resolvable:$true] %s321
          %324 = dma.vmem_to_hbm [thread:$0]  %s322, 128, %s319, %s305
        $region40: #{tpu_custom_call.1} parent=27 // pred_fallthru
          _
      $region28: #{tpu_custom_call.1} parent=5 // pred_fallthru
        _
      %p325 = scmp.le.s32.totalorder 2, %s15
      // Predicated region
      $region41: #{tpu_custom_call.1} parent=5 // pred_check
        %p326 = pneg %p325
      $region42: #{tpu_custom_call.1} parent=5 // pred_check_branch
        %328 = sbr.rel (%p326) target = $region44
      $region43: #{tpu_custom_call.1} parent=5 // pred_region
        %s329 = ssub.s32 %s15, 2
        // Predicated region
        $region45: #{tpu_custom_call.1} parent=43 // pred_check
          %p330 = pneg %p107
        $region46: #{tpu_custom_call.1} parent=43 // pred_check_branch
          %332 = sbr.rel (%p330) target = $region48
        $region47: #{tpu_custom_call.1} parent=43 // pred_region
          %s333 = sand.u32 %s92, 1
          %s334 = scalar_lea.sflag [#allocation4], %s333
          %s335 = sand.u32 %s92, 1
          %s336 = smul.addr %s335, 8
          %s337 = scalar_lea.vmem [#allocation7], %s336
          %338 = dma.done %s334, 128
        $region48: #{tpu_custom_call.1} parent=43 // pred_fallthru
          _
      $region44: #{tpu_custom_call.1} parent=5 // pred_fallthru
        _
    $region6: #{tpu_custom_call.1} parent=1 // loop_footer
      %s19 = sadd.s32 1, %s15
    $region7: #{tpu_custom_call.1} parent=1 // loop_footer_branch
      %14 = sbr.rel target = $region3
    $region8: #{tpu_custom_call.1} parent=1 // loop_exit
      _
    %339 = vsyncpa [#allocation3], 1
    %s340 = scalar_lea.sflag [#allocation3], 1
    %341 = vsyncpa %s340, 1
    %342 = vsyncpa [#allocation6], 1
    %s343 = scalar_lea.sflag [#allocation6], 1
    %344 = vsyncpa %s343, 1
    %345 = vsyncpa [#allocation4], 1
    %s346 = scalar_lea.sflag [#allocation4], 1
    %347 = vsyncpa %s346, 1

</llo_original>
